<compile_context>
chip_gen: v5e
topology: v5e:2x2
jax: 0.10.0
libtpu: 0.0.40
codegen_flags: <defaults>
</compile_context>

<pallas_src>
import functools

import jax
import jax.numpy as jnp
from jax.experimental import pallas as pl
from jax.experimental.pallas import tpu as pltpu

_LN_EPS = 1e-5                      # PyTorch LayerNorm default eps
_USE_BF16_MATMUL = False            # flip True for bf16 MXU inputs (f32 accumulate)
_VMEM_LIMIT = None


def _round_up(x, m):
    return (x + m - 1) // m * m


def _vmem_limit_bytes():
    """Per-generation scoped-VMEM budget with headroom for Pallas internals."""
    global _VMEM_LIMIT
    if _VMEM_LIMIT is None:
        cap = 128 * 1024 * 1024
        try:
            info = pltpu.get_tpu_info()
            cap = int(getattr(info, "vmem_capacity_bytes", cap)) or cap
        except Exception:
            pass
        # ~75% of physical: v7x (64 MiB) -> 48 MiB, v5e/v6e (128 MiB) -> 96 MiB.
        _VMEM_LIMIT = min((cap * 3) // 4, 110 * 1024 * 1024)
    return _VMEM_LIMIT


def _compiler_params(semantics):
    return pltpu.CompilerParams(dimension_semantics=tuple(semantics),
                                vmem_limit_bytes=_vmem_limit_bytes())


def _const_spec(shape):
    """BlockSpec for an operand that is identical for every grid step.

    Constant index_map keeps it VMEM-resident; Buffered(1) removes the useless
    second pipeline buffer (weights never change across the row/batch grid).
    """
    idx = lambda *_: (0,) * len(shape)
    try:
        return pl.BlockSpec(shape, idx, pipeline_mode=pl.Buffered(1))
    except TypeError:  # older jax without pipeline_mode on BlockSpec
        return pl.BlockSpec(shape, idx)


def _matmul_dtype():
    return jnp.bfloat16 if _USE_BF16_MATMUL else jnp.float32


def _store_dtype():
    return jnp.bfloat16 if _USE_BF16_MATMUL else jnp.float32


def _mm(a, b):
    dt = _matmul_dtype()
    return jnp.dot(a.astype(dt), b.astype(dt), preferred_element_type=jnp.float32)


def _qk_dot(a, b):
    # contract last dim of both -> avoids an explicit XLU transpose of the K block.
    dt = _matmul_dtype()
    return jax.lax.dot_general(a.astype(dt), b.astype(dt),
                               (((1,), (1,)), ((), ())),
                               preferred_element_type=jnp.float32)


def _layernorm_f32(x, g, b):
    mean = jnp.mean(x, axis=-1, keepdims=True)
    xc = x - mean
    var = jnp.mean(xc * xc, axis=-1, keepdims=True)
    return xc * jax.lax.rsqrt(var + _LN_EPS) * g + b


# ---------------------------------------------------------------------------
# Kernel 1: fused LayerNorm1 + QKV projection (one concatenated matmul)
# ---------------------------------------------------------------------------
def _ln_qkv_kernel(x_ref, g_ref, b_ref, w_ref, q_ref, k_ref, v_ref):
    xn = _layernorm_f32(x_ref[...].astype(jnp.float32), g_ref[...], b_ref[...])
    acc = _mm(xn, w_ref[...])                       # (tm, 3C), f32 accumulate
    c = q_ref.shape[-1]
    q_ref[...] = acc[:, :c].astype(q_ref.dtype)
    k_ref[...] = acc[:, c:2 * c].astype(k_ref.dtype)
    v_ref[...] = acc[:, 2 * c:].astype(v_ref.dtype)


def ln_qkv(x2d, gamma, beta, w_qkv, *, tm):
    m, c = x2d.shape
    row = pl.BlockSpec((tm, c), lambda i: (i, 0))
    out = jax.ShapeDtypeStruct((m, c), _store_dtype())
    return pl.pallas_call(
        _ln_qkv_kernel,
        grid=(pl.cdiv(m, tm),),
        in_specs=[row, _const_spec((1, c)), _const_spec((1, c)),
                  _const_spec((c, 3 * c))],
        out_specs=(row, row, row),
        out_shape=(out, out, out),
        compiler_params=_compiler_params(("parallel",)),
    )(x2d, gamma.reshape(1, c), beta.reshape(1, c), w_qkv)


# ---------------------------------------------------------------------------
# Kernel 2: flash attention (online softmax over KV tiles) + fused output proj
# ---------------------------------------------------------------------------
def _flash_attn_proj_kernel(q_ref, k_ref, v_ref, wp_ref, bp_ref, o_ref,
                            m_ref, l_ref, acc_ref, *,
                            num_heads, head_dim, scale, n_tokens, tk):
    ki = pl.program_id(2)
    n_kv = pl.num_programs(2)

    @pl.when(ki == 0)
    def _():
        m_ref[...] = jnp.full_like(m_ref, -jnp.inf)
        l_ref[...] = jnp.zeros_like(l_ref)
        acc_ref[...] = jnp.zeros_like(acc_ref)

    q_all = q_ref[0].astype(jnp.float32) * scale    # scale folded into q (tq, C)
    k_all = k_ref[0]
    v_all = v_ref[0]

    needs_mask = (n_tokens % tk) != 0               # static: only if KV tail is ragged
    if needs_mask:
        base = ki * tk
        kv_valid_row = (base + jax.lax.broadcasted_iota(jnp.int32, (1, tk), 1)) < n_tokens
        kv_valid_col = (base + jax.lax.broadcasted_iota(jnp.int32, (tk, 1), 0)) < n_tokens

    # Static head loop; each head's partial PV result is stored immediately into the
    # (tq, C) accumulator slice, so only one (tq, tk) score block is live at a time.
    # TODO(synk): pack 2 heads per MXU pass when head_dim <= 128 to fill the 256-wide MXU.
    for h in range(num_heads):
        lo = h * head_dim
        qh = q_all[:, lo:lo + head_dim]
        kh = k_all[:, lo:lo + head_dim]
        vh = v_all[:, lo:lo + head_dim].astype(jnp.float32)
        if needs_mask:
            vh = jnp.where(kv_valid_col, vh, 0.0)   # guard against OOB garbage in V
        s = _qk_dot(qh, kh)                         # (tq, tk)
        if needs_mask:
            s = jnp.where(kv_valid_row, s, -jnp.inf)
        m_prev = m_ref[h]                           # (tq, 1)
        m_new = jnp.maximum(m_prev, jnp.max(s, axis=-1, keepdims=True))
        alpha = jnp.exp(m_prev - m_new)
        p = jnp.exp(s - m_new)
        l_ref[h] = alpha * l_ref[h] + jnp.sum(p, axis=-1, keepdims=True)
        m_ref[h] = m_new
        pv = _mm(p, vh)                             # (tq, head_dim)
        acc_ref[:, lo:lo + head_dim] = alpha * acc_ref[:, lo:lo + head_dim] + pv

    @pl.when(ki == n_kv - 1)
    def _():
        # exact per-head softmax normalization (heads already merged column-wise)
        for h in range(num_heads):
            lo = h * head_dim
            acc_ref[:, lo:lo + head_dim] = acc_ref[:, lo:lo + head_dim] / l_ref[h]
        # fused output projection: saves one HBM write+read of the (M, C) attn output
        o_ref[0] = (_mm(acc_ref[...], wp_ref[...]) + bp_ref[...]).astype(o_ref.dtype)


def attention_proj(q, k, v, w_proj, b_proj, *, num_heads, scale, tq, tk):
    b, n, c = q.shape
    d = c // num_heads
    kern = functools.partial(_flash_attn_proj_kernel, num_heads=num_heads,
                             head_dim=d, scale=scale, n_tokens=n, tk=tk)
    q_spec = pl.BlockSpec((1, tq, c), lambda bi, qi, ki: (bi, qi, 0))
    kv_spec = pl.BlockSpec((1, tk, c), lambda bi, qi, ki: (bi, ki, 0))
    o_spec = pl.BlockSpec((1, tq, c), lambda bi, qi, ki: (bi, qi, 0))
    return pl.pallas_call(
        kern,
        grid=(b, pl.cdiv(n, tq), pl.cdiv(n, tk)),
        in_specs=[q_spec, kv_spec, kv_spec, _const_spec((c, c)), _const_spec((1, c))],
        out_specs=o_spec,
        out_shape=jax.ShapeDtypeStruct((b, n, c), _store_dtype()),
        scratch_shapes=[
            pltpu.VMEM((num_heads, tq, 1), jnp.float32),   # running max m
            pltpu.VMEM((num_heads, tq, 1), jnp.float32),   # running denom l
            pltpu.VMEM((tq, c), jnp.float32),              # merged-head accumulator
        ],
        compiler_params=_compiler_params(("parallel", "parallel", "arbitrary")),
    )(q, k, v, w_proj, b_proj.reshape(1, c))


# ---------------------------------------------------------------------------
# Kernel 3: fused residual + LayerNorm2 + MLP (exact GELU) + residual
# ---------------------------------------------------------------------------
def _res_mlp_kernel(a_ref, x_ref, g_ref, b_ref, w1_ref, b1_ref, w2_ref, b2_ref,
                    out_ref):
    x1 = x_ref[...].astype(jnp.float32) + a_ref[...].astype(jnp.float32)  # residual 1
    xn = _layernorm_f32(x1, g_ref[...], b_ref[...])
    h = _mm(xn, w1_ref[...]) + b1_ref[...]
    h = 0.5 * h * (1.0 + jax.lax.erf(h * 0.7071067811865476))            # exact GELU
    mo = _mm(h, w2_ref[...]) + b2_ref[...]
    out_ref[...] = (x1 + mo).astype(out_ref.dtype)                        # residual 2
    # TODO(synk): for MViT-L scale dims (hidden ~4.5k) tile the hidden dim with an f32
    # accumulator scratch (or bf16 weights) instead of keeping w1/w2 fully resident.


def res_mlp(attn_out2d, x2d, norm2_g, norm2_b, w1, b1, w2, b2, *, tm):
    m, c = x2d.shape
    hid = w1.shape[1]
    row = pl.BlockSpec((tm, c), lambda i: (i, 0))
    return pl.pallas_call(
        _res_mlp_kernel,
        grid=(pl.cdiv(m, tm),),
        in_specs=[row, row, _const_spec((1, c)), _const_spec((1, c)),
                  _const_spec((c, hid)), _const_spec((1, hid)),
                  _const_spec((hid, c)), _const_spec((1, c))],
        out_specs=row,
        out_shape=jax.ShapeDtypeStruct((m, c), jnp.float32),
        compiler_params=_compiler_params(("parallel",)),
    )(attn_out2d, x2d, norm2_g.reshape(1, c), norm2_b.reshape(1, c),
      w1, b1.reshape(1, hid), w2, b2.reshape(1, c))


# ---------------------------------------------------------------------------
# Parameters + MultiScaleBlock forward
# ---------------------------------------------------------------------------
def init_params(key, dim, num_heads, mlp_ratio=4.0):
    hidden = int(dim * mlp_ratio)
    ks = jax.random.split(key, 8)
    s = 0.02
    wq = jax.random.normal(ks[0], (dim, dim), jnp.float32) * s   # qkv_bias=False
    wk = jax.random.normal(ks[1], (dim, dim), jnp.float32) * s
    wv = jax.random.normal(ks[2], (dim, dim), jnp.float32) * s
    return dict(
        num_heads=num_heads,
        norm1_g=jnp.ones((dim,), jnp.float32),
        norm1_b=jnp.zeros((dim,), jnp.float32),
        w_qkv=jnp.concatenate([wq, wk, wv], axis=1),             # (C, 3C)
        w_proj=jax.random.normal(ks[3], (dim, dim), jnp.float32) * s,
        b_proj=jax.random.normal(ks[4], (dim,), jnp.float32) * s,
        norm2_g=jnp.ones((dim,), jnp.float32),
        norm2_b=jnp.zeros((dim,), jnp.float32),
        w1=jax.random.normal(ks[5], (dim, hidden), jnp.float32) * s,
        b1=jnp.zeros((hidden,), jnp.float32),
        w2=jax.random.normal(ks[6], (hidden, dim), jnp.float32) * s,
        b2=jnp.zeros((dim,), jnp.float32),
    )


def multiscale_block_forward(params, x, thw_shape):
    """x: (B, N, C) with N = 1 (cls) + T*H*W tokens."""
    B, N, C = x.shape
    H = params["num_heads"]
    D = C // H
    scale = D ** (-0.5)

    M = B * N
    tm = min(512, _round_up(M, 8))        # row tile for kernels 1 & 3
    tq = min(256, _round_up(N, 8))        # query tile (>=256 at real MViT scale)
    tk = min(512, _round_up(N, 8))        # KV tile

    x2d = x.reshape(M, C)                 # free reshape, no padding / slicing copies

    # ---- fused norm1 + QKV projection ----------------------------------------
    q2d, k2d, v2d = ln_qkv(x2d, params["norm1_g"], params["norm1_b"],
                           params["w_qkv"], tm=tm)
    q = q2d.reshape(B, N, C)
    k = k2d.reshape(B, N, C)
    v = v2d.reshape(B, N, C)

    # pool_q / pool_k / pool_v are None for kernel=(1,1,1), stride=(1,1,1):
    # attention_pool is the identity and thw_shape is unchanged.
    # TODO(synk): strided depthwise-Conv3d / MaxPool3d pooling path (stride > 1).
    q_shape = list(thw_shape)

    # ---- flash multi-head attention with fused output projection -------------
    o = attention_proj(q, k, v, params["w_proj"], params["b_proj"],
                       num_heads=H, scale=scale, tq=tq, tk=tk)       # (B, N, C)

    # skip path: pool_skip = MaxPool3d(kernel=1, stride=1) == identity -> x_res == x
    # drop_path = Identity, dim == dim_out -> no extra residual projection.
    out2d = res_mlp(o.reshape(M, C), x2d, params["norm2_g"], params["norm2_b"],
                    params["w1"], params["b1"], params["w2"], params["b2"], tm=tm)

    attn_out = jnp.zeros((1,), jnp.float32)                          # torch.zeros(1)
    return out2d.reshape(B, N, C), q_shape, attn_out


# ---------------------------------------------------------------------------
# Pure-JAX reference (mirrors the PyTorch module) for a correctness check
# ---------------------------------------------------------------------------
def _reference_forward(params, x):
    B, N, C = x.shape
    H = params["num_heads"]
    D = C // H

    def ln(v, g, b):
        mu = v.mean(-1, keepdims=True)
        var = ((v - mu) ** 2).mean(-1, keepdims=True)
        return (v - mu) / jnp.sqrt(var + _LN_EPS) * g + b

    xn = ln(x, params["norm1_g"], params["norm1_b"])
    qkv = xn @ params["w_qkv"]
    q, k, v = jnp.split(qkv, 3, axis=-1)
    heads = lambda t: t.reshape(B, N, H, D).transpose(0, 2, 1, 3)
    q, k, v = heads(q), heads(k), heads(v)
    attn = (q @ k.transpose(0, 1, 3, 2)) * (D ** -0.5)
    attn = jax.nn.softmax(attn, axis=-1)
    o = (attn @ v).transpose(0, 2, 1, 3).reshape(B, N, C)
    o = o @ params["w_proj"] + params["b_proj"]
    x1 = x + o
    x2 = ln(x1, params["norm2_g"], params["norm2_b"])
    h = x2 @ params["w1"] + params["b1"]
    h = 0.5 * h * (1.0 + jax.lax.erf(h * 0.7071067811865476))
    return x1 + (h @ params["w2"] + params["b2"])


# ---------------------------------------------------------------------------
if __name__ == "__main__":
    key = jax.random.PRNGKey(0)
    kp_, kx_ = jax.random.split(key)

    dim = 32
    num_heads = 4
    thw = (2, 4, 4)                       # T, H, W
    B = 2
    N = 1 + thw[0] * thw[1] * thw[2]      # cls token + spatial tokens = 33

    params = init_params(kp_, dim, num_heads, mlp_ratio=4.0)
    x = jax.random.normal(kx_, (B, N, dim), jnp.float32)

    y, thw_new, attn_out = multiscale_block_forward(params, x, thw)
    jax.block_until_ready(y)
    jax.block_until_ready(attn_out)

    assert y.shape == (B, N, dim), y.shape
    assert list(thw_new) == list(thw)
    assert bool(jnp.all(jnp.isfinite(y)))

    y_ref = _reference_forward(params, x)
    max_err = float(jnp.max(jnp.abs(y - y_ref)))
    assert max_err < 1e-3, f"mismatch vs reference: {max_err}"

    print("KERNEL_OK")
</pallas_src>

<mosaic_0001>
module attributes {stable_mosaic.version = 11 : i64} {
  func.func @_ln_qkv_kernel(%arg0: i32, %arg1: memref<72x32xf32, #tpu.memory_space<vmem>>, %arg2: memref<1x32xf32, #tpu.memory_space<vmem>>, %arg3: memref<1x32xf32, #tpu.memory_space<vmem>>, %arg4: memref<32x96xf32, #tpu.memory_space<vmem>>, %arg5: memref<72x32xf32, #tpu.memory_space<vmem>>, %arg6: memref<72x32xf32, #tpu.memory_space<vmem>>, %arg7: memref<72x32xf32, #tpu.memory_space<vmem>>) attributes {dimension_semantics = [#tpu.dimension_semantics<parallel>], iteration_bounds = array<i64: 1>, scalar_prefetch = 0 : i64, scratch_operands = 0 : i64, tpu.core_type = #tpu.core_type<tc>, window_params = [{transform_indices = @transform_0, window_bounds = array<i64: 72, 32>}, {pipeline_mode = #tpu.pipeline_mode<synchronous>, transform_indices = @transform_1, window_bounds = array<i64: 1, 32>}, {pipeline_mode = #tpu.pipeline_mode<synchronous>, transform_indices = @transform_2, window_bounds = array<i64: 1, 32>}, {pipeline_mode = #tpu.pipeline_mode<synchronous>, transform_indices = @transform_3, window_bounds = array<i64: 32, 96>}, {transform_indices = @transform_4, window_bounds = array<i64: 72, 32>}, {transform_indices = @transform_5, window_bounds = array<i64: 72, 32>}, {transform_indices = @transform_6, window_bounds = array<i64: 72, 32>}]} {
    %c0 = arith.constant 0 : index
    %c0_0 = arith.constant 0 : index
    %0 = vector.load %arg1[%c0, %c0_0] : memref<72x32xf32, #tpu.memory_space<vmem>>, vector<72x32xf32>
    %c0_1 = arith.constant 0 : index
    %c0_2 = arith.constant 0 : index
    %1 = vector.load %arg2[%c0_1, %c0_2] : memref<1x32xf32, #tpu.memory_space<vmem>>, vector<1x32xf32>
    %c0_3 = arith.constant 0 : index
    %c0_4 = arith.constant 0 : index
    %2 = vector.load %arg3[%c0_3, %c0_4] : memref<1x32xf32, #tpu.memory_space<vmem>>, vector<1x32xf32>
    %cst = arith.constant dense<0.000000e+00> : vector<72xf32>
    %3 = vector.multi_reduction <add>, %0, %cst [1] : vector<72x32xf32> to vector<72xf32>
    %4 = vector.shape_cast %3 : vector<72xf32> to vector<72x1xf32>
    %cst_5 = arith.constant 3.200000e+01 : f32
    %5 = vector.broadcast %cst_5 : f32 to vector<72x1xf32>
    %6 = arith.divf %4, %5 : vector<72x1xf32>
    %7 = vector.broadcast %6 : vector<72x1xf32> to vector<72x32xf32>
    %8 = arith.subf %0, %7 : vector<72x32xf32>
    %9 = arith.mulf %8, %8 : vector<72x32xf32>
    %cst_6 = arith.constant dense<0.000000e+00> : vector<72xf32>
    %10 = vector.multi_reduction <add>, %9, %cst_6 [1] : vector<72x32xf32> to vector<72xf32>
    %11 = vector.shape_cast %10 : vector<72xf32> to vector<72x1xf32>
    %cst_7 = arith.constant 3.200000e+01 : f32
    %12 = vector.broadcast %cst_7 : f32 to vector<72x1xf32>
    %13 = arith.divf %11, %12 : vector<72x1xf32>
    %cst_8 = arith.constant 9.99999974E-6 : f32
    %14 = vector.broadcast %cst_8 : f32 to vector<72x1xf32>
    %15 = arith.addf %13, %14 : vector<72x1xf32>
    %16 = math.rsqrt %15 : vector<72x1xf32>
    %17 = vector.broadcast %16 : vector<72x1xf32> to vector<72x32xf32>
    %18 = arith.mulf %8, %17 : vector<72x32xf32>
    %19 = vector.broadcast %1 : vector<1x32xf32> to vector<72x32xf32>
    %20 = arith.mulf %18, %19 : vector<72x32xf32>
    %21 = vector.broadcast %2 : vector<1x32xf32> to vector<72x32xf32>
    %22 = arith.addf %20, %21 : vector<72x32xf32>
    %c0_9 = arith.constant 0 : index
    %c0_10 = arith.constant 0 : index
    %23 = vector.load %arg4[%c0_9, %c0_10] : memref<32x96xf32, #tpu.memory_space<vmem>>, vector<32x96xf32>
    %cst_11 = arith.constant dense<0.000000e+00> : vector<72x96xf32>
    %24 = tpu.matmul %22, %23, %cst_11 {dimension_numbers = #tpu.dot_dimension_numbers<[1], [0], [0], [1], [0, 0, 1, 1], [], []>} : vector<72x32xf32>, vector<32x96xf32>, vector<72x96xf32> -> vector<72x96xf32>
    %25 = vector.extract_strided_slice %24 {offsets = [0, 0], sizes = [72, 32], strides = [1, 1]} : vector<72x96xf32> to vector<72x32xf32>
    %c0_12 = arith.constant 0 : index
    %c0_13 = arith.constant 0 : index
    %26 = vector.load %arg5[%c0_12, %c0_13] : memref<72x32xf32, #tpu.memory_space<vmem>>, vector<72x32xf32>
    tpu.vector_store %arg5[%c0_12, %c0_13], %25 {strides = array<i32>} : memref<72x32xf32, #tpu.memory_space<vmem>>, vector<72x32xf32>,
    %27 = vector.extract_strided_slice %24 {offsets = [0, 32], sizes = [72, 32], strides = [1, 1]} : vector<72x96xf32> to vector<72x32xf32>
    %c0_14 = arith.constant 0 : index
    %c0_15 = arith.constant 0 : index
    %28 = vector.load %arg6[%c0_14, %c0_15] : memref<72x32xf32, #tpu.memory_space<vmem>>, vector<72x32xf32>
    tpu.vector_store %arg6[%c0_14, %c0_15], %27 {strides = array<i32>} : memref<72x32xf32, #tpu.memory_space<vmem>>, vector<72x32xf32>,
    %29 = vector.extract_strided_slice %24 {offsets = [0, 64], sizes = [72, 32], strides = [1, 1]} : vector<72x96xf32> to vector<72x32xf32>
    %c0_16 = arith.constant 0 : index
    %c0_17 = arith.constant 0 : index
    %30 = vector.load %arg7[%c0_16, %c0_17] : memref<72x32xf32, #tpu.memory_space<vmem>>, vector<72x32xf32>
    tpu.vector_store %arg7[%c0_16, %c0_17], %29 {strides = array<i32>} : memref<72x32xf32, #tpu.memory_space<vmem>>, vector<72x32xf32>,
    return
  }
  func.func @transform_0(%arg0: i32) -> (i32, i32) {
    %c0_i32 = arith.constant 0 : i32
    %c0_i32_0 = arith.constant 0 : i32
    return %arg0, %c0_i32 : i32, i32
  }
  func.func @transform_1(%arg0: i32) -> (i32, i32) {
    %c0_i32 = arith.constant 0 : i32
    %c0_i32_0 = arith.constant 0 : i32
    %c0_i32_1 = arith.constant 0 : i32
    return %c0_i32, %c0_i32_0 : i32, i32
  }
  func.func @transform_2(%arg0: i32) -> (i32, i32) {
    %c0_i32 = arith.constant 0 : i32
    %c0_i32_0 = arith.constant 0 : i32
    %c0_i32_1 = arith.constant 0 : i32
    return %c0_i32, %c0_i32_0 : i32, i32
  }
  func.func @transform_3(%arg0: i32) -> (i32, i32) {
    %c0_i32 = arith.constant 0 : i32
    %c0_i32_0 = arith.constant 0 : i32
    %c0_i32_1 = arith.constant 0 : i32
    return %c0_i32, %c0_i32_0 : i32, i32
  }
  func.func @transform_4(%arg0: i32) -> (i32, i32) {
    %c0_i32 = arith.constant 0 : i32
    %c0_i32_0 = arith.constant 0 : i32
    return %arg0, %c0_i32 : i32, i32
  }
  func.func @transform_5(%arg0: i32) -> (i32, i32) {
    %c0_i32 = arith.constant 0 : i32
    %c0_i32_0 = arith.constant 0 : i32
    return %arg0, %c0_i32 : i32, i32
  }
  func.func @transform_6(%arg0: i32) -> (i32, i32) {
    %c0_i32 = arith.constant 0 : i32
    %c0_i32_0 = arith.constant 0 : i32
    return %arg0, %c0_i32 : i32, i32
  }
}

</mosaic_0001>

<llo_original>
// kernel: tpu_custom_call.1
$region0: #{tpu_custom_call.1}
  #allocation0 [shape = 'u32[]', space=smem, size = 0x4, offset = 0x4, fixed_abs, tag = 'smem constant byte address 0x4 - core index']
  #allocation1 [shape = 'u32[72,128]{1,0:T(1,128)}', space=vmem, size = 0x9000, scoped, tag = 'internal scratch']
  %s0 = inlined_call_operand.vmem [shape: f32[66,32], index: 0, kind: input, shape index: {}]
  %s1 = inlined_call_operand.vmem [shape: f32[1,32], index: 1, kind: input, shape index: {}]
  %s2 = inlined_call_operand.vmem [shape: f32[1,32], index: 2, kind: input, shape index: {}]
  %s3 = inlined_call_operand.vmem [shape: f32[32,96], index: 3, kind: input, shape index: {}]
  %s4 = inlined_call_operand.vmem [shape: f32[66,32], index: 4, kind: output, shape index: {0}]
  %s5 = inlined_call_operand.vmem [shape: f32[66,32], index: 5, kind: output, shape index: {1}]
  %s6 = inlined_call_operand.vmem [shape: f32[66,32], index: 6, kind: output, shape index: {2}]
  %7 = xla_tuple %s4, %s5, %s6
  %s8 = sld [smem:[#allocation0]]
  $region42: #{tpu_custom_call.1} parent=0
    _
  %s10 = ssub.s32 1, %s8
  %s11 = scalar_select 0, %s10, %s8
  // Predicated region
  $region2: #{tpu_custom_call.1} parent=0 // pred_check
    _
  $region3: #{tpu_custom_call.1} parent=0 // pred_check_branch
    %13 = sbr.rel (0) target = $region5
  $region4: #{tpu_custom_call.1} parent=0 // pred_region
    _
  $region5: #{tpu_custom_call.1} parent=0 // pred_fallthru
    _
  // Predicated region
  $region6: #{tpu_custom_call.1} parent=0 // pred_check
    _
  $region7: #{tpu_custom_call.1} parent=0 // pred_check_branch
    %15 = sbr.rel (0) target = $region9
  $region8: #{tpu_custom_call.1} parent=0 // pred_region
    _
  $region9: #{tpu_custom_call.1} parent=0 // pred_fallthru
    _
  // Predicated region
  $region10: #{tpu_custom_call.1} parent=0 // pred_check
    _
  $region11: #{tpu_custom_call.1} parent=0 // pred_check_branch
    %17 = sbr.rel (0) target = $region13
  $region12: #{tpu_custom_call.1} parent=0 // pred_region
    _
  $region13: #{tpu_custom_call.1} parent=0 // pred_fallthru
    _
  // Predicated region
  $region14: #{tpu_custom_call.1} parent=0 // pred_check
    _
  $region15: #{tpu_custom_call.1} parent=0 // pred_check_branch
    %19 = sbr.rel (0) target = $region17
  $region16: #{tpu_custom_call.1} parent=0 // pred_region
    _
  $region17: #{tpu_custom_call.1} parent=0 // pred_fallthru
    _
  %v20 = vld [vmem:[%s0] sm:$0xff]
  %v21 = vld [vmem:[%s0 + $0x8] sm:$0xff]
  %v22 = vld [vmem:[%s0 + $0x10] sm:$0xff]
  %v23 = vld [vmem:[%s0 + $0x18] sm:$0xff]
  %v24 = vld [vmem:[%s0 + $0x20] sm:$0xff]
  %v25 = vld [vmem:[%s0 + $0x28] sm:$0xff]
  %v26 = vld [vmem:[%s0 + $0x30] sm:$0xff]
  %v27 = vld [vmem:[%s0 + $0x38] sm:$0xff]
  %v28 = vld [vmem:[%s0 + $0x40] sm:$0xff]
  %v29 = vld [vmem:[%s1] sm:$0x1]
  %v30 = vld [vmem:[%s2] sm:$0x1]
  %vm31 = vcmask 261120
  %v32 = vsel %vm31, %v20, 0.0
  %33 = vadd.xlane.f32.xlu0 %v32
  %v34 = vpop.xlane.xlu0 %33
  %v35 = vsel %vm31, %v21, 0.0
  %36 = vadd.xlane.f32.xlu0 %v35
  %v37 = vpop.xlane.xlu0 %36
  %v38 = vsel %vm31, %v22, 0.0
  %39 = vadd.xlane.f32.xlu0 %v38
  %v40 = vpop.xlane.xlu0 %39
  %v41 = vsel %vm31, %v23, 0.0
  %42 = vadd.xlane.f32.xlu0 %v41
  %v43 = vpop.xlane.xlu0 %42
  %v44 = vsel %vm31, %v24, 0.0
  %45 = vadd.xlane.f32.xlu0 %v44
  %v46 = vpop.xlane.xlu0 %45
  %v47 = vsel %vm31, %v25, 0.0
  %48 = vadd.xlane.f32.xlu0 %v47
  %v49 = vpop.xlane.xlu0 %48
  %v50 = vsel %vm31, %v26, 0.0
  %51 = vadd.xlane.f32.xlu0 %v50
  %v52 = vpop.xlane.xlu0 %51
  %v53 = vsel %vm31, %v27, 0.0
  %54 = vadd.xlane.f32.xlu0 %v53
  %v55 = vpop.xlane.xlu0 %54
  %v56 = vsel %vm31, %v28, 0.0
  %57 = vadd.xlane.f32.xlu0 %v56
  %v58 = vpop.xlane.xlu0 %57
  %v59 = vrcp.pop 32.0
  %v60 = vmul.f32 32.0, %v59
  %v61 = vsub.f32 1.0, %v60
  %v62 = vmul.f32 %v59, %v61
  %v63 = vadd.f32 %v59, %v62
  %vm64 = vweird.f32 %v59
  %v65 = vsel %vm64, %v59, %v63
  %v66 = vmul.f32 %v34, %v65
  %v67 = vmul.f32 %v37, %v65
  %v68 = vmul.f32 %v40, %v65
  %v69 = vmul.f32 %v43, %v65
  %v70 = vmul.f32 %v46, %v65
  %v71 = vmul.f32 %v49, %v65
  %v72 = vmul.f32 %v52, %v65
  %v73 = vmul.f32 %v55, %v65
  %v74 = vmul.f32 %v58, %v65
  %v75 = vsub.f32 %v20, %v66
  %v76 = vsub.f32 %v21, %v67
  %v77 = vsub.f32 %v22, %v68
  %v78 = vsub.f32 %v23, %v69
  %v79 = vsub.f32 %v24, %v70
  %v80 = vsub.f32 %v25, %v71
  %v81 = vsub.f32 %v26, %v72
  %v82 = vsub.f32 %v27, %v73
  %v83 = vsub.f32 %v28, %v74
  %v84 = vmul.f32 %v75, %v75
  %v85 = vmul.f32 %v76, %v76
  %v86 = vmul.f32 %v77, %v77
  %v87 = vmul.f32 %v78, %v78
  %v88 = vmul.f32 %v79, %v79
  %v89 = vmul.f32 %v80, %v80
  %v90 = vmul.f32 %v81, %v81
  %v91 = vmul.f32 %v82, %v82
  %v92 = vmul.f32 %v83, %v83
  %v93 = vsel %vm31, %v84, 0.0
  %94 = vadd.xlane.f32.xlu0 %v93
  %v95 = vpop.xlane.xlu0 %94
  %v96 = vsel %vm31, %v85, 0.0
  %97 = vadd.xlane.f32.xlu0 %v96
  %v98 = vpop.xlane.xlu0 %97
  %v99 = vsel %vm31, %v86, 0.0
  %100 = vadd.xlane.f32.xlu0 %v99
  %v101 = vpop.xlane.xlu0 %100
  %v102 = vsel %vm31, %v87, 0.0
  %103 = vadd.xlane.f32.xlu0 %v102
  %v104 = vpop.xlane.xlu0 %103
  %v105 = vsel %vm31, %v88, 0.0
  %106 = vadd.xlane.f32.xlu0 %v105
  %v107 = vpop.xlane.xlu0 %106
  %v108 = vsel %vm31, %v89, 0.0
  %109 = vadd.xlane.f32.xlu0 %v108
  %v110 = vpop.xlane.xlu0 %109
  %v111 = vsel %vm31, %v90, 0.0
  %112 = vadd.xlane.f32.xlu0 %v111
  %v113 = vpop.xlane.xlu0 %112
  %v114 = vsel %vm31, %v91, 0.0
  %115 = vadd.xlane.f32.xlu0 %v114
  %v116 = vpop.xlane.xlu0 %115
  %v117 = vsel %vm31, %v92, 0.0
  %118 = vadd.xlane.f32.xlu0 %v117
  %v119 = vpop.xlane.xlu0 %118
  %v120 = vmul.f32 %v95, %v65
  %v121 = vmul.f32 %v98, %v65
  %v122 = vmul.f32 %v101, %v65
  %v123 = vmul.f32 %v104, %v65
  %v124 = vmul.f32 %v107, %v65
  %v125 = vmul.f32 %v110, %v65
  %v126 = vmul.f32 %v113, %v65
  %v127 = vmul.f32 %v116, %v65
  %v128 = vmul.f32 %v119, %v65
  %v129 = vadd.f32 %v120, 1e-05
  %v130 = vadd.f32 %v121, 1e-05
  %v131 = vadd.f32 %v122, 1e-05
  %v132 = vadd.f32 %v123, 1e-05
  %v133 = vadd.f32 %v124, 1e-05
  %v134 = vadd.f32 %v125, 1e-05
  %v135 = vadd.f32 %v126, 1e-05
  %v136 = vadd.f32 %v127, 1e-05
  %v137 = vadd.f32 %v128, 1e-05
  %v138 = vrsqrt.pop %v129
  %v139 = vmul.f32 %v138, %v129
  %v140 = vmul.f32 %v139, %v138
  %v141 = vmul.f32 0.5, %v140
  %v142 = vsub.f32 1.5, %v141
  %v143 = vmul.f32 %v138, %v142
  %vm144 = vweird.f32 %v129
  %vm145 = vweird.f32 %v138
  %vm146 = vmor %vm144, %vm145
  %v147 = vsel %vm146, %v138, %v143
  %v148 = vrsqrt.pop %v130
  %v149 = vmul.f32 %v148, %v130
  %v150 = vmul.f32 %v149, %v148
  %v151 = vmul.f32 0.5, %v150
  %v152 = vsub.f32 1.5, %v151
  %v153 = vmul.f32 %v148, %v152
  %vm154 = vweird.f32 %v130
  %vm155 = vweird.f32 %v148
  %vm156 = vmor %vm154, %vm155
  %v157 = vsel %vm156, %v148, %v153
  %v158 = vrsqrt.pop %v131
  %v159 = vmul.f32 %v158, %v131
  %v160 = vmul.f32 %v159, %v158
  %v161 = vmul.f32 0.5, %v160
  %v162 = vsub.f32 1.5, %v161
  %v163 = vmul.f32 %v158, %v162
  %vm164 = vweird.f32 %v131
  %vm165 = vweird.f32 %v158
  %vm166 = vmor %vm164, %vm165
  %v167 = vsel %vm166, %v158, %v163
  %v168 = vrsqrt.pop %v132
  %v169 = vmul.f32 %v168, %v132
  %v170 = vmul.f32 %v169, %v168
  %v171 = vmul.f32 0.5, %v170
  %v172 = vsub.f32 1.5, %v171
  %v173 = vmul.f32 %v168, %v172
  %vm174 = vweird.f32 %v132
  %vm175 = vweird.f32 %v168
  %vm176 = vmor %vm174, %vm175
  %v177 = vsel %vm176, %v168, %v173
  %v178 = vrsqrt.pop %v133
  %v179 = vmul.f32 %v178, %v133
  %v180 = vmul.f32 %v179, %v178
  %v181 = vmul.f32 0.5, %v180
  %v182 = vsub.f32 1.5, %v181
  %v183 = vmul.f32 %v178, %v182
  %vm184 = vweird.f32 %v133
  %vm185 = vweird.f32 %v178
  %vm186 = vmor %vm184, %vm185
  %v187 = vsel %vm186, %v178, %v183
  %v188 = vrsqrt.pop %v134
  %v189 = vmul.f32 %v188, %v134
  %v190 = vmul.f32 %v189, %v188
  %v191 = vmul.f32 0.5, %v190
  %v192 = vsub.f32 1.5, %v191
  %v193 = vmul.f32 %v188, %v192
  %vm194 = vweird.f32 %v134
  %vm195 = vweird.f32 %v188
  %vm196 = vmor %vm194, %vm195
  %v197 = vsel %vm196, %v188, %v193
  %v198 = vrsqrt.pop %v135
  %v199 = vmul.f32 %v198, %v135
  %v200 = vmul.f32 %v199, %v198
  %v201 = vmul.f32 0.5, %v200
  %v202 = vsub.f32 1.5, %v201
  %v203 = vmul.f32 %v198, %v202
  %vm204 = vweird.f32 %v135
  %vm205 = vweird.f32 %v198
  %vm206 = vmor %vm204, %vm205
  %v207 = vsel %vm206, %v198, %v203
  %v208 = vrsqrt.pop %v136
  %v209 = vmul.f32 %v208, %v136
  %v210 = vmul.f32 %v209, %v208
  %v211 = vmul.f32 0.5, %v210
  %v212 = vsub.f32 1.5, %v211
  %v213 = vmul.f32 %v208, %v212
  %vm214 = vweird.f32 %v136
  %vm215 = vweird.f32 %v208
  %vm216 = vmor %vm214, %vm215
  %v217 = vsel %vm216, %v208, %v213
  %v218 = vrsqrt.pop %v137
  %v219 = vmul.f32 %v218, %v137
  %v220 = vmul.f32 %v219, %v218
  %v221 = vmul.f32 0.5, %v220
  %v222 = vsub.f32 1.5, %v221
  %v223 = vmul.f32 %v218, %v222
  %vm224 = vweird.f32 %v137
  %vm225 = vweird.f32 %v218
  %vm226 = vmor %vm224, %vm225
  %v227 = vsel %vm226, %v218, %v223
  %v228 = vmul.f32 %v75, %v147
  %v229 = vmul.f32 %v76, %v157
  %v230 = vmul.f32 %v77, %v167
  %v231 = vmul.f32 %v78, %v177
  %v232 = vmul.f32 %v79, %v187
  %v233 = vmul.f32 %v80, %v197
  %v234 = vmul.f32 %v81, %v207
  %v235 = vmul.f32 %v82, %v217
  %v236 = vmul.f32 %v83, %v227
  %v238 = vperm.slane %v29, 0
  %v240 = vmul.f32 %v228, %v238
  %v241 = vmul.f32 %v229, %v238
  %v242 = vmul.f32 %v230, %v238
  %v243 = vmul.f32 %v231, %v238
  %v244 = vmul.f32 %v232, %v238
  %v245 = vmul.f32 %v233, %v238
  %v246 = vmul.f32 %v234, %v238
  %v247 = vmul.f32 %v235, %v238
  %v248 = vmul.f32 %v236, %v238
  %v250 = vperm.slane %v30, 0
  %v252 = vadd.f32 %v240, %v250
  %v253 = vadd.f32 %v241, %v250
  %v254 = vadd.f32 %v242, %v250
  %v255 = vadd.f32 %v243, %v250
  %v256 = vadd.f32 %v244, %v250
  %v257 = vadd.f32 %v245, %v250
  %v258 = vadd.f32 %v246, %v250
  %v259 = vadd.f32 %v247, %v250
  %v260 = vadd.f32 %v248, %v250
  %v261 = vld [vmem:[%s3] sm:$0xff]
  %v262 = vld [vmem:[%s3 + $0x8] sm:$0xff]
  %v263 = vld [vmem:[%s3 + $0x10] sm:$0xff]
  %v264 = vld [vmem:[%s3 + $0x18] sm:$0xff]
  %v266 = vsel %vm31, %v252, 0
  %v269 = vsel %vm31, %v253, 0
  %v272 = vsel %vm31, %v254, 0
  %v275 = vsel %vm31, %v255, 0
  %v278 = vsel %vm31, %v256, 0
  %v281 = vsel %vm31, %v257, 0
  %v284 = vsel %vm31, %v258, 0
  %v287 = vsel %vm31, %v259, 0
  %v290 = vsel %vm31, %v260, 0
  %292 = vmatpush.msra.mxu0 0.0
  %293 = vmatpush.msra.mxu0 0.0
  %294 = vmatpush.msra.mxu0 0.0
  %295 = vmatpush.msra.mxu0 0.0
  %296 = vmatpush.msra.mxu0 0.0
  %297 = vmatpush.msra.mxu0 0.0
  %298 = vmatpush.msra.mxu0 0.0
  %299 = vmatpush.msra.mxu0 0.0
  %300 = vmatpush.msra.mxu0 0.0
  %301 = vmatpush.msra.mxu0 0.0
  %302 = vmatpush.msra.mxu0 0.0
  %303 = vmatpush.msra.mxu0 0.0
  %304 = vmatpush.msra.mxu0 %v264
  %305 = vmatpush.msra.mxu0 %v263
  %306 = vmatpush.msra.mxu0 %v262
  %307 = vmatpush.msra.mxu0 %v261
  %308 = vmatmul.f32.gmra.mxu0 %v266
  %v309 = vpop.f32.mrf.mxu0
  %v310 = vadd.f32 0.0, %v309
  %311 = vmatmul.f32.gmra.mxu0 %v269
  %v312 = vpop.f32.mrf.mxu0
  %v313 = vadd.f32 0.0, %v312
  %314 = vmatmul.f32.gmra.mxu0 %v272
  %v315 = vpop.f32.mrf.mxu0
  %v316 = vadd.f32 0.0, %v315
  %317 = vmatmul.f32.gmra.mxu0 %v275
  %v318 = vpop.f32.mrf.mxu0
  %v319 = vadd.f32 0.0, %v318
  %320 = vmatmul.f32.gmra.mxu0 %v278
  %v321 = vpop.f32.mrf.mxu0
  %v322 = vadd.f32 0.0, %v321
  %323 = vmatmul.f32.gmra.mxu0 %v281
  %v324 = vpop.f32.mrf.mxu0
  %v325 = vadd.f32 0.0, %v324
  %326 = vmatmul.f32.gmra.mxu0 %v284
  %v327 = vpop.f32.mrf.mxu0
  %v328 = vadd.f32 0.0, %v327
  %329 = vmatmul.f32.gmra.mxu0 %v287
  %v330 = vpop.f32.mrf.mxu0
  %v331 = vadd.f32 0.0, %v330
  %332 = vmatmul.f32.gmra.mxu0 %v290
  %v333 = vpop.f32.mrf.mxu0
  %v334 = vadd.f32 0.0, %v333
  %335 = vdwg.mxu0
  %336 = vst.msk [vmem:[%s4] sm:$0xff] %vm31, %v310
  %337 = vst.msk [vmem:[%s4 + $0x8] sm:$0xff] %vm31, %v313
  %338 = vst.msk [vmem:[%s4 + $0x10] sm:$0xff] %vm31, %v316
  %339 = vst.msk [vmem:[%s4 + $0x18] sm:$0xff] %vm31, %v319
  %340 = vst.msk [vmem:[%s4 + $0x20] sm:$0xff] %vm31, %v322
  %341 = vst.msk [vmem:[%s4 + $0x28] sm:$0xff] %vm31, %v325
  %342 = vst.msk [vmem:[%s4 + $0x30] sm:$0xff] %vm31, %v328
  %343 = vst.msk [vmem:[%s4 + $0x38] sm:$0xff] %vm31, %v331
  %344 = vst.msk [vmem:[%s4 + $0x40] sm:$0xff] %vm31, %v334
  %354 = vrot.lane.b32.xlu0 %v310, 96
  %v355 = vpop.permute.xlu0 %354
  %356 = vrot.lane.b32.xlu0 %v313, 96
  %v357 = vpop.permute.xlu0 %356
  %358 = vrot.lane.b32.xlu0 %v316, 96
  %v359 = vpop.permute.xlu0 %358
  %360 = vrot.lane.b32.xlu0 %v319, 96
  %v361 = vpop.permute.xlu0 %360
  %362 = vrot.lane.b32.xlu0 %v322, 96
  %v363 = vpop.permute.xlu0 %362
  %364 = vrot.lane.b32.xlu0 %v325, 96
  %v365 = vpop.permute.xlu0 %364
  %366 = vrot.lane.b32.xlu0 %v328, 96
  %v367 = vpop.permute.xlu0 %366
  %368 = vrot.lane.b32.xlu0 %v331, 96
  %v369 = vpop.permute.xlu0 %368
  %370 = vrot.lane.b32.xlu0 %v334, 96
  %v371 = vpop.permute.xlu0 %370
  %381 = vst.msk [vmem:[%s5] sm:$0xff] %vm31, %v355
  %382 = vst.msk [vmem:[%s5 + $0x8] sm:$0xff] %vm31, %v357
  %383 = vst.msk [vmem:[%s5 + $0x10] sm:$0xff] %vm31, %v359
  %384 = vst.msk [vmem:[%s5 + $0x18] sm:$0xff] %vm31, %v361
  %385 = vst.msk [vmem:[%s5 + $0x20] sm:$0xff] %vm31, %v363
  %386 = vst.msk [vmem:[%s5 + $0x28] sm:$0xff] %vm31, %v365
  %387 = vst.msk [vmem:[%s5 + $0x30] sm:$0xff] %vm31, %v367
  %388 = vst.msk [vmem:[%s5 + $0x38] sm:$0xff] %vm31, %v369
  %389 = vst.msk [vmem:[%s5 + $0x40] sm:$0xff] %vm31, %v371
  %390 = vrot.lane.b32.xlu0 %v310, 64
  %v391 = vpop.permute.xlu0 %390
  %392 = vrot.lane.b32.xlu0 %v313, 64
  %v393 = vpop.permute.xlu0 %392
  %394 = vrot.lane.b32.xlu0 %v316, 64
  %v395 = vpop.permute.xlu0 %394
  %396 = vrot.lane.b32.xlu0 %v319, 64
  %v397 = vpop.permute.xlu0 %396
  %398 = vrot.lane.b32.xlu0 %v322, 64
  %v399 = vpop.permute.xlu0 %398
  %400 = vrot.lane.b32.xlu0 %v325, 64
  %v401 = vpop.permute.xlu0 %400
  %402 = vrot.lane.b32.xlu0 %v328, 64
  %v403 = vpop.permute.xlu0 %402
  %404 = vrot.lane.b32.xlu0 %v331, 64
  %v405 = vpop.permute.xlu0 %404
  %406 = vrot.lane.b32.xlu0 %v334, 64
  %v407 = vpop.permute.xlu0 %406
  %417 = vst.msk [vmem:[%s6] sm:$0xff] %vm31, %v391
  %418 = vst.msk [vmem:[%s6 + $0x8] sm:$0xff] %vm31, %v393
  %419 = vst.msk [vmem:[%s6 + $0x10] sm:$0xff] %vm31, %v395
  %420 = vst.msk [vmem:[%s6 + $0x18] sm:$0xff] %vm31, %v397
  %421 = vst.msk [vmem:[%s6 + $0x20] sm:$0xff] %vm31, %v399
  %422 = vst.msk [vmem:[%s6 + $0x28] sm:$0xff] %vm31, %v401
  %423 = vst.msk [vmem:[%s6 + $0x30] sm:$0xff] %vm31, %v403
  %424 = vst.msk [vmem:[%s6 + $0x38] sm:$0xff] %vm31, %v405
  %425 = vst.msk [vmem:[%s6 + $0x40] sm:$0xff] %vm31, %v407
  // Predicated region
  $region18: #{tpu_custom_call.1} parent=0 // pred_check
    _
  $region19: #{tpu_custom_call.1} parent=0 // pred_check_branch
    %427 = sbr.rel (0) target = $region21
  $region20: #{tpu_custom_call.1} parent=0 // pred_region
    _
  $region21: #{tpu_custom_call.1} parent=0 // pred_fallthru
    _
  // Predicated region
  $region22: #{tpu_custom_call.1} parent=0 // pred_check
    _
  $region23: #{tpu_custom_call.1} parent=0 // pred_check_branch
    %429 = sbr.rel (0) target = $region25
  $region24: #{tpu_custom_call.1} parent=0 // pred_region
    _
  $region25: #{tpu_custom_call.1} parent=0 // pred_fallthru
    _
  // Predicated region
  $region26: #{tpu_custom_call.1} parent=0 // pred_check
    _
  $region27: #{tpu_custom_call.1} parent=0 // pred_check_branch
    %431 = sbr.rel (0) target = $region29
  $region28: #{tpu_custom_call.1} parent=0 // pred_region
    _
  $region29: #{tpu_custom_call.1} parent=0 // pred_fallthru
    _
  // Predicated region
  $region30: #{tpu_custom_call.1} parent=0 // pred_check
    _
  $region31: #{tpu_custom_call.1} parent=0 // pred_check_branch
    %433 = sbr.rel (0) target = $region33
  $region32: #{tpu_custom_call.1} parent=0 // pred_region
    _
  $region33: #{tpu_custom_call.1} parent=0 // pred_fallthru
    _
  // Predicated region
  $region34: #{tpu_custom_call.1} parent=0 // pred_check
    _
  $region35: #{tpu_custom_call.1} parent=0 // pred_check_branch
    %435 = sbr.rel (0) target = $region37
  $region36: #{tpu_custom_call.1} parent=0 // pred_region
    _
  $region37: #{tpu_custom_call.1} parent=0 // pred_fallthru
    _
  // Predicated region
  $region38: #{tpu_custom_call.1} parent=0 // pred_check
    _
  $region39: #{tpu_custom_call.1} parent=0 // pred_check_branch
    %437 = sbr.rel (0) target = $region41
  $region40: #{tpu_custom_call.1} parent=0 // pred_region
    _
  $region41: #{tpu_custom_call.1} parent=0 // pred_fallthru
    _

</llo_original>
